<compile_context>
chip_gen: v7x
topology: tpu7x:2x2x1
jax: 0.10.0
libtpu: 0.0.40
codegen_flags: <defaults>
</compile_context>

<pallas_src>
import functools

import jax
import jax.numpy as jnp
from jax.experimental import pallas as pl
from jax.experimental.pallas import tpu as pltpu

_LANES = 128
_SUBLANES = 8
_MAX_BLOCK_ROWS = 4096  # multiple of 32; (4096,128) f32 tile = 2 MiB


def _round_up(x: int, m: int) -> int:
    return ((x + m - 1) // m) * m


def _cdiv(a: int, b: int) -> int:
    return -(-a // b)


def _simpo_kernel(n_ref, c_ref, r_ref, out_ref, acc_ref, *,
                  beta: float, gamma: float,
                  block_rows: int, per_shard: int, needs_mask: bool):
    shard = pl.program_id(0)
    i = pl.program_id(1)

    @pl.when(i == 0)
    def _init():
        acc_ref[...] = jnp.zeros_like(acc_ref)

    # Blocks are (block_rows, 128); cast in-kernel, all math in f32.
    chosen = c_ref[...].astype(jnp.float32)
    rejected = r_ref[...].astype(jnp.float32)

    x = beta * (chosen - rejected - gamma)
    # Numerically stable -logsigmoid(x) = log1p(exp(-|x|)) - min(x, 0)
    loss = jnp.log1p(jnp.exp(-jnp.abs(x))) - jnp.minimum(x, 0.0)

    def _accumulate(vals):
        # Sublane/lane-preserving partial sum: pure VPU adds into (8,128).
        acc_ref[...] += jnp.sum(vals.reshape(-1, _SUBLANES, _LANES), axis=0)

    if needs_mask:
        n_val = n_ref[0]
        block_elems = block_rows * _LANES
        block_start = (shard * per_shard + i) * block_elems
        has_pad = (block_start + block_elems) > n_val

        @pl.when(has_pad)
        def _masked():
            row_ids = jax.lax.broadcasted_iota(
                jnp.int32, (block_rows, _LANES), 0)
            lane_ids = jax.lax.broadcasted_iota(
                jnp.int32, (block_rows, _LANES), 1)
            flat = block_start + row_ids * _LANES + lane_ids
            _accumulate(jnp.where(flat < n_val, loss, 0.0))

        @pl.when(jnp.logical_not(has_pad))
        def _unmasked():
            _accumulate(loss)
    else:
        _accumulate(loss)

    @pl.when(i == pl.num_programs(1) - 1)
    def _finalize():
        # Emit the raw per-shard partial; cross-lane reduce + 1/n in wrapper.
        out_ref[...] = acc_ref[...].reshape(1, _SUBLANES, _LANES)


def simpo_loss(policy_chosen_logps, policy_rejected_logps,
               beta: float = 0.1, gamma: float = 0.5):
    assert policy_chosen_logps.shape == policy_rejected_logps.shape
    assert policy_chosen_logps.ndim == 1
    n = policy_chosen_logps.shape[0]
    assert n > 0, "SimPo loss requires a non-empty batch"

    # Keep native dtype (no wrapper-side f32 cast); just unify the pair.
    dtype = jnp.result_type(policy_chosen_logps.dtype,
                            policy_rejected_logps.dtype)
    itemsize = jnp.dtype(dtype).itemsize
    sublane_mult = max(_SUBLANES, 32 // max(1, itemsize))  # 8 f32, 16 bf16, 32 i8

    rows = max(1, _cdiv(n, _LANES))
    block_rows = min(_MAX_BLOCK_ROWS, _round_up(rows, sublane_mult))
    total_blocks = _cdiv(rows, block_rows)

    # Use both TensorCores on v7x when there is enough work; harmless on 1-TC.
    num_shards = 2 if total_blocks >= 2 else 1
    per_shard = _cdiv(total_blocks, num_shards)
    rows_pad = num_shards * per_shard * block_rows
    n_pad = rows_pad * _LANES
    needs_mask = (n_pad != n)

    c = policy_chosen_logps.astype(dtype)
    r = policy_rejected_logps.astype(dtype)
    if n_pad != n:
        c = jnp.pad(c, (0, n_pad - n))
        r = jnp.pad(r, (0, n_pad - n))
    c = c.reshape(rows_pad, _LANES)
    r = r.reshape(rows_pad, _LANES)

    n_arr = jnp.asarray([n], dtype=jnp.int32)

    kernel = functools.partial(
        _simpo_kernel,
        beta=float(beta), gamma=float(gamma),
        block_rows=block_rows, per_shard=per_shard, needs_mask=needs_mask,
    )

    in_map = lambda s, i, n_ref, p=per_shard: (s * p + i, 0)
    out_map = lambda s, i, n_ref: (s, 0, 0)

    partials = pl.pallas_call(
        kernel,
        out_shape=jax.ShapeDtypeStruct((num_shards, _SUBLANES, _LANES),
                                       jnp.float32),
        grid_spec=pltpu.PrefetchScalarGridSpec(
            num_scalar_prefetch=1,
            grid=(num_shards, per_shard),
            in_specs=[
                pl.BlockSpec((block_rows, _LANES), in_map),
                pl.BlockSpec((block_rows, _LANES), in_map),
            ],
            out_specs=pl.BlockSpec((1, _SUBLANES, _LANES), out_map),
            scratch_shapes=[pltpu.VMEM((_SUBLANES, _LANES), jnp.float32)],
        ),
        compiler_params=pltpu.CompilerParams(
            dimension_semantics=("parallel", "arbitrary"),
        ),
    )(n_arr, c, r)

    # Tiny epilogue: sum (num_shards, 8, 128) partials and divide by true n.
    return jnp.sum(partials) * (1.0 / n)


def _reference(chosen, rejected, beta=0.1, gamma=0.5):
    logits = chosen - rejected - gamma
    return jnp.mean(-jax.nn.log_sigmoid(beta * logits))


if __name__ == "__main__":
    key = jax.random.PRNGKey(0)
    k1, k2 = jax.random.split(key)

    batch = 8  # number of (chosen, rejected) pairs; exercises the mask path
    policy_chosen_logps = jax.random.normal(k1, (batch,), dtype=jnp.float32) * 5.0
    policy_rejected_logps = jax.random.normal(k2, (batch,), dtype=jnp.float32) * 5.0

    loss = simpo_loss(policy_chosen_logps, policy_rejected_logps,
                      beta=0.1, gamma=0.5)
    loss = jax.block_until_ready(loss)

    ref = _reference(policy_chosen_logps, policy_rejected_logps,
                     beta=0.1, gamma=0.5)
    assert jnp.allclose(loss, ref, rtol=1e-5, atol=1e-5), (loss, ref)

    print("KERNEL_OK")
</pallas_src>

<mosaic_0001>
module attributes {stable_mosaic.version = 11 : i64} {
  func.func @_simpo_kernel(%arg0: i32, %arg1: i32, %arg2: memref<1xi32, #tpu.memory_space<smem>>, %arg3: memref<8x128xf32, #tpu.memory_space<vmem>>, %arg4: memref<8x128xf32, #tpu.memory_space<vmem>>, %arg5: memref<1x8x128xf32, #tpu.memory_space<vmem>>, %arg6: memref<8x128xf32, #tpu.memory_space<vmem>>) attributes {dimension_semantics = [#tpu.dimension_semantics<parallel>, #tpu.dimension_semantics<arbitrary>], iteration_bounds = array<i64: 1, 1>, scalar_prefetch = 1 : i64, scratch_operands = 1 : i64, tpu.core_type = #tpu.core_type<tc>, window_params = [{transform_indices = @transform_0, window_bounds = array<i64: 8, 128>}, {transform_indices = @transform_1, window_bounds = array<i64: 8, 128>}, {transform_indices = @transform_2, window_bounds = array<i64: 1, 8, 128>}]} {
    %c0_i32 = arith.constant 0 : i32
    %0 = arith.cmpi eq, %arg1, %c0_i32 : i32
    %1 = arith.extui %0 : i1 to i32
    %c0_i32_0 = arith.constant 0 : i32
    %2 = arith.cmpi ne, %1, %c0_i32_0 : i32
    scf.if %2 {
      %cst_13 = arith.constant 0.000000e+00 : f32
      %32 = vector.broadcast %cst_13 : f32 to vector<8x128xf32>
      %c0_14 = arith.constant 0 : index
      %c0_15 = arith.constant 0 : index
      %33 = vector.load %arg6[%c0_14, %c0_15] : memref<8x128xf32, #tpu.memory_space<vmem>>, vector<8x128xf32>
      tpu.vector_store %arg6[%c0_14, %c0_15], %32 {strides = array<i32>} : memref<8x128xf32, #tpu.memory_space<vmem>>, vector<8x128xf32>,
    } else {
    }
    %c0 = arith.constant 0 : index
    %c0_1 = arith.constant 0 : index
    %3 = vector.load %arg3[%c0, %c0_1] : memref<8x128xf32, #tpu.memory_space<vmem>>, vector<8x128xf32>
    %c0_2 = arith.constant 0 : index
    %c0_3 = arith.constant 0 : index
    %4 = vector.load %arg4[%c0_2, %c0_3] : memref<8x128xf32, #tpu.memory_space<vmem>>, vector<8x128xf32>
    %5 = arith.subf %3, %4 : vector<8x128xf32>
    %cst = arith.constant 5.000000e-01 : f32
    %6 = vector.broadcast %cst : f32 to vector<8x128xf32>
    %7 = arith.subf %5, %6 : vector<8x128xf32>
    %cst_4 = arith.constant 1.000000e-01 : f32
    %8 = vector.broadcast %cst_4 : f32 to vector<8x128xf32>
    %9 = arith.mulf %8, %7 : vector<8x128xf32>
    %10 = math.absf %9 : vector<8x128xf32>
    %cst_5 = arith.constant 0.000000e+00 : f32
    %11 = vector.broadcast %cst_5 : f32 to vector<8x128xf32>
    %12 = arith.subf %11, %10 : vector<8x128xf32>
    %13 = math.exp %12 : vector<8x128xf32>
    %14 = math.log1p %13 : vector<8x128xf32>
    %cst_6 = arith.constant 0.000000e+00 : f32
    %15 = vector.broadcast %cst_6 : f32 to vector<8x128xf32>
    %16 = arith.minimumf %9, %15 : vector<8x128xf32>
    %17 = arith.subf %14, %16 : vector<8x128xf32>
    %c0_7 = arith.constant 0 : index
    %18 = memref.load %arg2[%c0_7] : memref<1xi32, #tpu.memory_space<smem>>
    %c1_i32 = arith.constant 1 : i32
    %19 = arith.muli %arg0, %c1_i32 : i32
    %20 = arith.addi %19, %arg1 : i32
    %c1024_i32 = arith.constant 1024 : i32
    %21 = arith.muli %20, %c1024_i32 : i32
    %c1024_i32_8 = arith.constant 1024 : i32
    %22 = arith.addi %21, %c1024_i32_8 : i32
    %23 = arith.cmpi sgt, %22, %18 : i32
    %24 = arith.extui %23 : i1 to i32
    %c0_i32_9 = arith.constant 0 : i32
    %25 = arith.cmpi ne, %24, %c0_i32_9 : i32
    scf.if %25 {
      %32 = tpu.iota {dimensions = array<i32: 0>} : vector<8x128xi32>
      %33 = tpu.iota {dimensions = array<i32: 1>} : vector<8x128xi32>
      %c128_i32 = arith.constant 128 : i32
      %34 = vector.broadcast %c128_i32 : i32 to vector<8x128xi32>
      %35 = arith.muli %32, %34 : vector<8x128xi32>
      %36 = vector.broadcast %21 : i32 to vector<8x128xi32>
      %37 = arith.addi %36, %35 : vector<8x128xi32>
      %38 = arith.addi %37, %33 : vector<8x128xi32>
      %39 = vector.broadcast %18 : i32 to vector<8x128xi32>
      %40 = arith.cmpi slt, %38, %39 : vector<8x128xi32>
      %cst_13 = arith.constant 0.000000e+00 : f32
      %41 = vector.broadcast %cst_13 : f32 to vector<8x128xf32>
      %42 = arith.select %40, %17, %41 : vector<8x128xi1>, vector<8x128xf32>
      %c0_14 = arith.constant 0 : index
      %c0_15 = arith.constant 0 : index
      %43 = vector.load %arg6[%c0_14, %c0_15] : memref<8x128xf32, #tpu.memory_space<vmem>>, vector<8x128xf32>
      %44 = vector.shape_cast %42 : vector<8x128xf32> to vector<1x8x128xf32>
      %cst_16 = arith.constant dense<0.000000e+00> : vector<8x128xf32>
      %45 = vector.multi_reduction <add>, %44, %cst_16 [0] : vector<1x8x128xf32> to vector<8x128xf32>
      %46 = arith.addf %43, %45 : vector<8x128xf32>
      %c0_17 = arith.constant 0 : index
      %c0_18 = arith.constant 0 : index
      %47 = vector.load %arg6[%c0_17, %c0_18] : memref<8x128xf32, #tpu.memory_space<vmem>>, vector<8x128xf32>
      tpu.vector_store %arg6[%c0_17, %c0_18], %46 {strides = array<i32>} : memref<8x128xf32, #tpu.memory_space<vmem>>, vector<8x128xf32>,
    } else {
    }
    %true = arith.constant true
    %26 = arith.xori %23, %true : i1
    %27 = arith.extui %26 : i1 to i32
    %c0_i32_10 = arith.constant 0 : i32
    %28 = arith.cmpi ne, %27, %c0_i32_10 : i32
    scf.if %28 {
      %c0_13 = arith.constant 0 : index
      %c0_14 = arith.constant 0 : index
      %32 = vector.load %arg6[%c0_13, %c0_14] : memref<8x128xf32, #tpu.memory_space<vmem>>, vector<8x128xf32>
      %33 = vector.shape_cast %17 : vector<8x128xf32> to vector<1x8x128xf32>
      %cst_15 = arith.constant dense<0.000000e+00> : vector<8x128xf32>
      %34 = vector.multi_reduction <add>, %33, %cst_15 [0] : vector<1x8x128xf32> to vector<8x128xf32>
      %35 = arith.addf %32, %34 : vector<8x128xf32>
      %c0_16 = arith.constant 0 : index
      %c0_17 = arith.constant 0 : index
      %36 = vector.load %arg6[%c0_16, %c0_17] : memref<8x128xf32, #tpu.memory_space<vmem>>, vector<8x128xf32>
      tpu.vector_store %arg6[%c0_16, %c0_17], %35 {strides = array<i32>} : memref<8x128xf32, #tpu.memory_space<vmem>>, vector<8x128xf32>,
    } else {
    }
    %c0_i32_11 = arith.constant 0 : i32
    %29 = arith.cmpi eq, %arg1, %c0_i32_11 : i32
    %30 = arith.extui %29 : i1 to i32
    %c0_i32_12 = arith.constant 0 : i32
    %31 = arith.cmpi ne, %30, %c0_i32_12 : i32
    scf.if %31 {
      %c0_13 = arith.constant 0 : index
      %c0_14 = arith.constant 0 : index
      %32 = vector.load %arg6[%c0_13, %c0_14] : memref<8x128xf32, #tpu.memory_space<vmem>>, vector<8x128xf32>
      %33 = vector.shape_cast %32 : vector<8x128xf32> to vector<1x8x128xf32>
      %c0_15 = arith.constant 0 : index
      %c0_16 = arith.constant 0 : index
      %c0_17 = arith.constant 0 : index
      %34 = vector.load %arg5[%c0_15, %c0_16, %c0_17] : memref<1x8x128xf32, #tpu.memory_space<vmem>>, vector<1x8x128xf32>
      tpu.vector_store %arg5[%c0_15, %c0_16, %c0_17], %33 {strides = array<i32>} : memref<1x8x128xf32, #tpu.memory_space<vmem>>, vector<1x8x128xf32>,
    } else {
    }
    return
  }
  func.func @transform_0(%arg0: i32, %arg1: i32, %arg2: memref<1xi32, #tpu.memory_space<smem>>) -> (i32, i32) {
    %c1_i32 = arith.constant 1 : i32
    %0 = arith.muli %arg0, %c1_i32 : i32
    %1 = arith.addi %0, %arg1 : i32
    %c0_i32 = arith.constant 0 : i32
    %c0_i32_0 = arith.constant 0 : i32
    return %1, %c0_i32 : i32, i32
  }
  func.func @transform_1(%arg0: i32, %arg1: i32, %arg2: memref<1xi32, #tpu.memory_space<smem>>) -> (i32, i32) {
    %c1_i32 = arith.constant 1 : i32
    %0 = arith.muli %arg0, %c1_i32 : i32
    %1 = arith.addi %0, %arg1 : i32
    %c0_i32 = arith.constant 0 : i32
    %c0_i32_0 = arith.constant 0 : i32
    return %1, %c0_i32 : i32, i32
  }
  func.func @transform_2(%arg0: i32, %arg1: i32, %arg2: memref<1xi32, #tpu.memory_space<smem>>) -> (i32, i32, i32) {
    %c0_i32 = arith.constant 0 : i32
    %c0_i32_0 = arith.constant 0 : i32
    %c0_i32_1 = arith.constant 0 : i32
    return %arg0, %c0_i32, %c0_i32_0 : i32, i32, i32
  }
}

</mosaic_0001>

<llo_original>
// kernel: tpu_custom_call.1
$region0: #{tpu_custom_call.1}
  #allocation0 [shape = 'u32[]', space=smem, size = 0x4, offset = 0x4, fixed_abs, tag = 'smem constant byte address 0x4 - core index']
  #allocation1 [shape = 'u32[144,128]{1,0:T(1,128)}', space=vmem, size = 0x12000, scoped, tag = 'internal scratch']
  #allocation2 [shape = 'f32[8,128]{1,0:T(8,128)}', space=vmem, size = 0x1000, scoped, tag = 'scratch operand']
  #allocation3 [shape = 's32[1]{0}', space=sflag, size = 0x4, scoped, tag = 'scoped memory for tpu_custom_call.1']
  #allocation4 [shape = 's32[1]{0:T(128)S(6)}', space=smem, size = 0x200, scoped, tag = 'prefetched SMEM operand 0']
  %s0 = inlined_call_operand.<no memory space> [shape: s32[1], index: 0, kind: input, shape index: {}]
  %s1 = inlined_call_operand.hbm [shape: f32[8,128], index: 1, kind: input, shape index: {}]
  %s2 = inlined_call_operand.hbm [shape: f32[8,128], index: 2, kind: input, shape index: {}]
  %s3 = inlined_call_operand.hbm [shape: f32[1,8,128], index: 3, kind: output, shape index: {}]
  %s4 = sld [smem:[#allocation0]]
  $region42: #{tpu_custom_call.1} parent=0
    _
  %s6 = ssub.s32 1, %s4
  %s7 = scalar_select 0, %s6, %s4
  %8 = sst [smem:[#allocation4]] %s0
  $region1: #{tpu_custom_call.1} parent=0
    #allocation5 [shape = 'u8[4096]{0}', space=vmem, size = 0x1000, scoped, tag = 'input window, operand 1, single buffered']
    #allocation6 [shape = 's32[1]{0}', space=sflag, size = 0x4, scoped, tag = 'scoped memory for tpu_custom_call.1']
    #allocation7 [shape = 's32[1]{0}', space=sflag, size = 0x4, scoped, tag = 'scoped memory for tpu_custom_call.1']
    #allocation8 [shape = 'u8[4096]{0}', space=vmem, size = 0x1000, scoped, tag = 'input window, operand 2, single buffered']
    #allocation9 [shape = 's32[1]{0}', space=sflag, size = 0x4, scoped, tag = 'scoped memory for tpu_custom_call.1']
    #allocation10 [shape = 'u8[4096]{0}', space=vmem, size = 0x1000, scoped, tag = 'output window, operand 0, single buffered']
    %9 = vsyncpa [#allocation6], 0
    %10 = vsyncpa [#allocation9], 0
    %11 = vsyncpa [#allocation7], 0
    // Predicated region
    $region2: #{tpu_custom_call.1} parent=1 // pred_check
      _
    $region3: #{tpu_custom_call.1} parent=1 // pred_check_branch
      %13 = sbr.rel (0) target = $region5
    $region4: #{tpu_custom_call.1} parent=1 // pred_region
      %s14 = sadd.s32 0, 0
      %s16 = ssub.s32 128, 128
      %17 = vsyncadd [#allocation6], %s16
      %s18 = smul.addr %s14, 128
      %s19 = scalar_lea.hbm %s1, %s18
      %s21 = sshll.u32 [#allocation5], 4
      %s22 = int_to_ptr.vmem [resolvable:$true] %s21
      %24 = dma.hbm_to_vmem [thread:$0]  %s19, 128, %s22, [#allocation6]
    $region5: #{tpu_custom_call.1} parent=1 // pred_fallthru
      _
    // Predicated region
    $region6: #{tpu_custom_call.1} parent=1 // pred_check
      _
    $region7: #{tpu_custom_call.1} parent=1 // pred_check_branch
      %26 = sbr.rel (0) target = $region9
    $region8: #{tpu_custom_call.1} parent=1 // pred_region
      %s27 = sadd.s32 0, 0
      %s29 = ssub.s32 128, 128
      %30 = vsyncadd [#allocation9], %s29
      %s31 = smul.addr %s27, 128
      %s32 = scalar_lea.hbm %s2, %s31
      %s34 = sshll.u32 [#allocation8], 4
      %s35 = int_to_ptr.vmem [resolvable:$true] %s34
      %37 = dma.hbm_to_vmem [thread:$0]  %s32, 128, %s35, [#allocation9]
    $region9: #{tpu_custom_call.1} parent=1 // pred_fallthru
      _
    // Predicated region
    $region10: #{tpu_custom_call.1} parent=1 // pred_check
      _
    $region11: #{tpu_custom_call.1} parent=1 // pred_check_branch
      %39 = sbr.rel (0) target = $region13
    $region12: #{tpu_custom_call.1} parent=1 // pred_region
      %40 = dma.done [#allocation6], 128
    $region13: #{tpu_custom_call.1} parent=1 // pred_fallthru
      _
    // Predicated region
    $region14: #{tpu_custom_call.1} parent=1 // pred_check
      _
    $region15: #{tpu_custom_call.1} parent=1 // pred_check_branch
      %42 = sbr.rel (0) target = $region17
    $region16: #{tpu_custom_call.1} parent=1 // pred_region
      %43 = dma.done [#allocation9], 128
    $region17: #{tpu_custom_call.1} parent=1 // pred_fallthru
      _
    %s44 = sadd.s32 0, 0
    %s45 = sadd.s32 0, 0
    %p46 = scmp.eq.s32.totalorder 0, 0
    // Predicated region
    $region18: #{tpu_custom_call.1} parent=1 // pred_check
      %p47 = pneg %p46
    $region19: #{tpu_custom_call.1} parent=1 // pred_check_branch
      %49 = sbr.rel (%p47) target = $region21
    $region20: #{tpu_custom_call.1} parent=1 // pred_region
      %50 = vst [vmem:[#allocation2] sm:$0xff] 0.0
    $region21: #{tpu_custom_call.1} parent=1 // pred_fallthru
      _
    %v51 = vld [vmem:[#allocation5] sm:$0xff]
    %v52 = vld [vmem:[#allocation8] sm:$0xff]
    %v53 = vsub.f32 %v51, %v52
    %v54 = vsub.f32 %v53, 0.5
    %v55 = vmul.f32 %v54, 0.1
    %v56 = vand.u32 2147483647, %v55
    %v57 = vsub.f32 0.0, %v56
    %v58 = vmul.f32 %v57, 1.442695
    %v59 = vpow.pop %v58
    %v60 = vadd.f32 %v59, 1.0
    %v61 = vlog2.pop %v60
    %v62 = vmul.f32 %v61, 0.6931472
    %v63 = vmul.f32 -0.5, %v59
    %v64 = vadd.f32 %v63, 1.0
    %v65 = vmul.f32 %v64, %v59
    %v66 = vand.u32 2147483647, %v59
    %vm67 = vcmp.lt.f32.partialorder %v66, 0.0004427343
    %v68 = vsel %vm67, %v65, %v62
    %v69 = vmin.f32 %v55, 0.0
    %v70 = vsub.f32 %v68, %v69
    %s71 = sld [smem:[#allocation4]]
    %s72 = sadd.s32 0, 0
    %s73 = smul.u32 %s72, 1024
    %s74 = sadd.s32 %s73, 1024
    %p75 = scmp.gt.s32.totalorder %s74, %s71
    // Predicated region
    $region22: #{tpu_custom_call.1} parent=1 // pred_check
      %p76 = pneg %p75
    $region23: #{tpu_custom_call.1} parent=1 // pred_check_branch
      %78 = sbr.rel (%p76) target = $region25
    $region24: #{tpu_custom_call.1} parent=1 // pred_region
      %v79 = vlaneseq
      %v80 = vshrl.u32 %v79, 7
      %v81 = vlaneseq
      %v82 = vand.u32 %v81, 127
      %v83 = vmul.u32 %v80, 128
      %v84 = vstv %s73
      %v85 = vadd.s32 %v84, %v83
      %v86 = vadd.s32 %v85, %v82
      %v87 = vstv %s71
      %vm88 = vcmp.lt.s32.totalorder %v86, %v87
      %v89 = vsel %vm88, %v70, 0.0
      %v90 = vld [vmem:[#allocation2] sm:$0xff]
      %v91 = vadd.f32 %v89, 0.0
      %v92 = vadd.f32 %v90, %v91
      %93 = vst [vmem:[#allocation2] sm:$0xff] %v92
    $region25: #{tpu_custom_call.1} parent=1 // pred_fallthru
      _
    %p94 = scmp.le.s32.totalorder %s74, %s71
    // Predicated region
    $region26: #{tpu_custom_call.1} parent=1 // pred_check
      %p95 = pneg %p94
    $region27: #{tpu_custom_call.1} parent=1 // pred_check_branch
      %97 = sbr.rel (%p95) target = $region29
    $region28: #{tpu_custom_call.1} parent=1 // pred_region
      %v98 = vld [vmem:[#allocation2] sm:$0xff]
      %v99 = vadd.f32 %v70, 0.0
      %v100 = vadd.f32 %v98, %v99
      %101 = vst [vmem:[#allocation2] sm:$0xff] %v100
    $region29: #{tpu_custom_call.1} parent=1 // pred_fallthru
      _
    // Predicated region
    $region30: #{tpu_custom_call.1} parent=1 // pred_check
      %p102 = pneg %p46
    $region31: #{tpu_custom_call.1} parent=1 // pred_check_branch
      %104 = sbr.rel (%p102) target = $region33
    $region32: #{tpu_custom_call.1} parent=1 // pred_region
      %v105 = vld [vmem:[#allocation2] sm:$0xff]
      %106 = vst [vmem:[#allocation10] sm:$0xff] %v105
    $region33: #{tpu_custom_call.1} parent=1 // pred_fallthru
      _
    // Predicated region
    $region34: #{tpu_custom_call.1} parent=1 // pred_check
      _
    $region35: #{tpu_custom_call.1} parent=1 // pred_check_branch
      %108 = sbr.rel (0) target = $region37
    $region36: #{tpu_custom_call.1} parent=1 // pred_region
      %s110 = ssub.s32 128, 128
      %111 = vsyncadd [#allocation7], %s110
      %s113 = sshll.u32 [#allocation10], 4
      %s114 = int_to_ptr.vmem [resolvable:$true] %s113
      %116 = dma.vmem_to_hbm [thread:$0]  %s114, 128, %s3, [#allocation7]
    $region37: #{tpu_custom_call.1} parent=1 // pred_fallthru
      _
    // Predicated region
    $region38: #{tpu_custom_call.1} parent=1 // pred_check
      _
    $region39: #{tpu_custom_call.1} parent=1 // pred_check_branch
      %118 = sbr.rel (0) target = $region41
    $region40: #{tpu_custom_call.1} parent=1 // pred_region
      %119 = dma.done [#allocation7], 128
    $region41: #{tpu_custom_call.1} parent=1 // pred_fallthru
      _
    %120 = vsyncpa [#allocation6], 1
    %121 = vsyncpa [#allocation9], 1
    %122 = vsyncpa [#allocation7], 1

</llo_original>
